<compile_context>
chip_gen: v5e
topology: v5e:2x2
jax: 0.10.0
libtpu: 0.0.40
codegen_flags: <defaults>
</compile_context>

<pallas_src>
import jax
import jax.numpy as jnp
from jax.experimental import pallas as pl
from jax.experimental.pallas import tpu as pltpu  # noqa: F401  (kept for TPU-specific tuning hooks)

VOCAB = 32        # small stand-in vocabulary
EMBED_DIM = 128   # word_embedding_size (200 in the torch module) -> lane-friendly stand-in
PAD_ID = 0        # padding token id => mask 0, embedding row zeroed
LANE = 128


# ----------------------------------------------------------------------------
# Single-shot embedding kernel: one-hot gather for ALL slices in one MXU pass.
# ----------------------------------------------------------------------------
def _embed_kernel(ids_ref, table_ref, vec_ref):
    ids = ids_ref[...]                      # (1, R) int32 — token ids on the lane axis
    table = table_ref[...]                  # (V, E) f32, fully VMEM-resident
    V, _ = table.shape
    _, R = ids.shape

    # Transposed one-hot (V, R): vocab index runs down the sublanes, rows across lanes.
    # ids (1, R) broadcasts down the sublanes (cheap sublane broadcast, no XLU).
    iota_v = jax.lax.broadcasted_iota(jnp.int32, (V, R), 0)
    onehot = (iota_v == ids).astype(table.dtype)            # (V, R)

    # vec(R, E) = onehot^T @ table — single MXU matmul, contraction over the vocab dim.
    # padding_idx=0 semantics come for free: table row PAD_ID is zeroed on the host.
    vec_ref[...] = jax.lax.dot_general(
        onehot, table,
        dimension_numbers=(((0,), (0,)), ((), ())),
        preferred_element_type=jnp.float32,
    ).astype(vec_ref.dtype)


def embed_tokens(ids_row, table):
    """ids_row: (1, R) int32 (R multiple of 128), table: (V, E) f32 -> (R, E) f32."""
    _, R = ids_row.shape
    V, E = table.shape
    return pl.pallas_call(
        _embed_kernel,
        out_shape=jax.ShapeDtypeStruct((R, E), jnp.float32),
        # Grid-less call: full-array blocks, no pipelining/double-buffering needed.
        in_specs=[
            pl.BlockSpec((1, R), lambda: (0, 0)),   # ids: one lane-dense row
            pl.BlockSpec((V, E), lambda: (0, 0)),   # embedding table, VMEM-resident
        ],
        out_specs=pl.BlockSpec((R, E), lambda: (0, 0)),  # lane-dense (E = 128) stores
    )(ids_row, table)


# ----------------------------------------------------------------------------
# TestModel.forward equivalent.
# ----------------------------------------------------------------------------
def test_model_forward(params, contents, question_ans, logics, sample_ids, seed=0):
    """
    contents:     (batch, contents_num, content_seq) int32 token ids
    question_ans: (batch, question_seq) int32 token ids
    logics, sample_ids: unused by the compute path (as in the torch forward)

    Returns (ans, aux):
      ans: (batch, 2) f32, ~N(0,1)  -- the torch.randn(batch, 2) return value
      aux: embeddings / masks / lengths for question and contents (returned so the
           embedding pallas work is consumed and cannot be dead-code-eliminated).
    """
    # TODO(synk): the torch forward starts with IPython `embed()` (interactive debugger)
    #             and prints diagnostics when any length == 0 — no Pallas equivalent.
    del logics, sample_ids

    batch = question_ans.shape[0]
    table = params["embedding"]
    V, E = table.shape
    contents_num = contents.shape[1]
    S_c = contents.shape[2]
    S_q = question_ans.shape[1]
    S = max(S_c, S_q)
    N = contents_num + 1

    # nn.Embedding(padding_idx=0): enforce a zero padding row once on the host so the
    # kernel needs no extra mask pass.
    table = table.at[PAD_ID].set(0.0)

    # Stack question + all content slices into one (N, B, S) tensor (pad with PAD_ID),
    # then flatten everything into a single lane-dense (1, R) row of token ids.
    q = jnp.pad(question_ans.astype(jnp.int32), ((0, 0), (0, S - S_q)),
                constant_values=PAD_ID)
    c = jnp.pad(contents.astype(jnp.int32), ((0, 0), (0, 0), (0, S - S_c)),
                constant_values=PAD_ID)
    ids_all = jnp.concatenate([q[:, None, :], c], axis=1)          # (B, N, S)
    ids_all = jnp.transpose(ids_all, (1, 0, 2))                    # (N, B, S)

    R = N * batch * S
    R_pad = ((R + LANE - 1) // LANE) * LANE                        # lane-multiple row
    ids_row = ids_all.reshape(1, R)
    if R_pad != R:
        ids_row = jnp.pad(ids_row, ((0, 0), (0, R_pad - R)), constant_values=PAD_ID)

    # One grid-less pallas_call for ALL slices at once.
    vec_flat = embed_tokens(ids_row, table)[:R]                    # (R, E)
    vec = vec_flat.reshape(N, batch, S, E)                         # (N, B, S, E)

    # Padding masks / lengths: trivial narrow-lane VPU work -> plain XLA.
    mask = (ids_all != PAD_ID).astype(jnp.float32)                 # (N, B, S)
    lengths = jnp.sum(mask, axis=2).astype(jnp.int32)              # (N, B)

    # torch.randn(batch, 2): plain XLA, computed exactly once (was fused + replicated
    # per grid step in the previous kernel, which wrote lane-width-2 masked stores).
    ans = jax.random.normal(jax.random.PRNGKey(seed), (batch, 2), jnp.float32)

    aux = {
        "question_vec": vec[0, :, :S_q, :],
        "question_mask": mask[0, :, :S_q],
        "question_lengths": lengths[0],
        "content_vec": vec[1:, :, :S_c, :],
        "content_mask": mask[1:, :, :S_c],
        "content_lengths": lengths[1:],
    }
    return ans, aux


if __name__ == "__main__":
    key = jax.random.PRNGKey(0)
    k_tab, k_con, k_q = jax.random.split(key, 3)

    batch, contents_num, content_seq, question_seq = 2, 3, 16, 16

    # deterministic "trained" embedding table (Word2VecEmbedding stand-in)
    embedding_table = jax.random.normal(k_tab, (VOCAB, EMBED_DIM), jnp.float32) * 0.1
    params = {"embedding": embedding_table}
    # NOTE: LSTM encoders, Conv_gate_layers and the decision MLP from __init__ are never
    # reached by this forward, so their parameters are intentionally not materialized.

    contents = jax.random.randint(k_con, (batch, contents_num, content_seq), 1, VOCAB,
                                  dtype=jnp.int32)
    question_ans = jax.random.randint(k_q, (batch, question_seq), 1, VOCAB,
                                      dtype=jnp.int32)
    # zero out trailing positions to exercise the padding mask / length reduction
    contents = contents.at[:, :, content_seq - 4:].set(PAD_ID)
    question_ans = question_ans.at[:, question_seq - 3:].set(PAD_ID)

    logics = jnp.ones((batch,), jnp.int32)
    sample_ids = jnp.arange(batch, dtype=jnp.int32)

    ans, aux = test_model_forward(params, contents, question_ans, logics, sample_ids, seed=0)
    ans, aux = jax.block_until_ready((ans, aux))

    # shape / dtype checks (torch forward returns randn(batch, 2))
    assert ans.shape == (batch, 2) and ans.dtype == jnp.float32
    assert bool(jnp.all(jnp.isfinite(ans)))
    assert aux["question_vec"].shape == (batch, question_seq, EMBED_DIM)
    assert aux["content_vec"].shape == (contents_num, batch, content_seq, EMBED_DIM)

    # correctness check of the in-kernel embedding lookup vs a plain-XLA reference
    table_ref = embedding_table.at[PAD_ID].set(0.0)
    q_mask_ref = (question_ans != PAD_ID)
    q_vec_ref = table_ref[question_ans]
    assert bool(jnp.allclose(aux["question_vec"], q_vec_ref, atol=1e-5))
    assert bool(jnp.all(aux["question_lengths"] == q_mask_ref.sum(1).astype(jnp.int32)))
    c0 = contents[:, 0, :]
    c0_mask_ref = (c0 != PAD_ID)
    c0_vec_ref = table_ref[c0]
    assert bool(jnp.allclose(aux["content_vec"][0], c0_vec_ref, atol=1e-5))
    assert bool(jnp.all(aux["content_lengths"][0] == c0_mask_ref.sum(1).astype(jnp.int32)))

    print("KERNEL_OK")
</pallas_src>

<mosaic_0001>
module attributes {stable_mosaic.version = 11 : i64} {
  func.func @_embed_kernel(%arg0: memref<1x128xi32, #tpu.memory_space<vmem>>, %arg1: memref<32x128xf32, #tpu.memory_space<vmem>>, %arg2: memref<128x128xf32, #tpu.memory_space<vmem>>) attributes {dimension_semantics = [], scalar_prefetch = 0 : i64, scratch_operands = 0 : i64, tpu.core_type = #tpu.core_type<tc>} {
    %c0 = arith.constant 0 : index
    %c0_0 = arith.constant 0 : index
    %0 = vector.load %arg0[%c0, %c0_0] : memref<1x128xi32, #tpu.memory_space<vmem>>, vector<1x128xi32>
    %c0_1 = arith.constant 0 : index
    %c0_2 = arith.constant 0 : index
    %1 = vector.load %arg1[%c0_1, %c0_2] : memref<32x128xf32, #tpu.memory_space<vmem>>, vector<32x128xf32>
    %2 = tpu.iota {dimensions = array<i32: 0>} : vector<32x128xi32>
    %3 = vector.broadcast %0 : vector<1x128xi32> to vector<32x128xi32>
    %4 = arith.cmpi eq, %2, %3 : vector<32x128xi32>
    %5 = arith.extui %4 : vector<32x128xi1> to vector<32x128xi32>
    %6 = arith.sitofp %5 : vector<32x128xi32> to vector<32x128xf32>
    %cst = arith.constant dense<0.000000e+00> : vector<128x128xf32>
    %7 = tpu.matmul %6, %1, %cst {dimension_numbers = #tpu.dot_dimension_numbers<[0], [0], [1], [1], [0, 1, 1, 1], [], []>} : vector<32x128xf32>, vector<32x128xf32>, vector<128x128xf32> -> vector<128x128xf32>
    %c0_3 = arith.constant 0 : index
    %c0_4 = arith.constant 0 : index
    %8 = vector.load %arg2[%c0_3, %c0_4] : memref<128x128xf32, #tpu.memory_space<vmem>>, vector<128x128xf32>
    tpu.vector_store %arg2[%c0_3, %c0_4], %7 {strides = array<i32>} : memref<128x128xf32, #tpu.memory_space<vmem>>, vector<128x128xf32>,
    return
  }
}

</mosaic_0001>

<llo_original>
// kernel: tpu_custom_call.1
$region0: #{tpu_custom_call.1}
  #allocation0 [shape = 'u32[]', space=smem, size = 0x4, offset = 0x4, fixed_abs, tag = 'smem constant byte address 0x4 - core index']
  #allocation1 [shape = 'u32[72,128]{1,0:T(1,128)}', space=vmem, size = 0x9000, scoped, tag = 'internal scratch']
  %s0 = inlined_call_operand.hbm [shape: s32[1,128], index: 0, kind: input, shape index: {}]
  %s1 = inlined_call_operand.hbm [shape: f32[32,128], index: 1, kind: input, shape index: {}]
  %s2 = inlined_call_operand.hbm [shape: f32[128,128], index: 2, kind: output, shape index: {}]
  %s3 = sld [smem:[#allocation0]]
  $region26: #{tpu_custom_call.1} parent=0
    _
  %s5 = ssub.s32 1, %s3
  %s6 = scalar_select 0, %s5, %s3
  $region1: #{tpu_custom_call.1} parent=0
    #allocation2 [shape = 'u8[512]{0}', space=vmem, size = 0x400, scoped, tag = 'input window, operand 0, single buffered']
    #allocation3 [shape = 's32[1]{0}', space=sflag, size = 0x4, scoped, tag = 'scoped memory for tpu_custom_call.1']
    #allocation4 [shape = 's32[1]{0}', space=sflag, size = 0x4, scoped, tag = 'scoped memory for tpu_custom_call.1']
    #allocation5 [shape = 'u8[16384]{0}', space=vmem, size = 0x4000, scoped, tag = 'input window, operand 1, single buffered']
    #allocation6 [shape = 's32[1]{0}', space=sflag, size = 0x4, scoped, tag = 'scoped memory for tpu_custom_call.1']
    #allocation7 [shape = 'u8[65536]{0}', space=vmem, size = 0x10000, scoped, tag = 'output window, operand 0, single buffered']
    %7 = vsyncpa [#allocation3], 0
    %8 = vsyncpa [#allocation6], 0
    %9 = vsyncpa [#allocation4], 0
    // Predicated region
    $region2: #{tpu_custom_call.1} parent=1 // pred_check
      _
    $region3: #{tpu_custom_call.1} parent=1 // pred_check_branch
      %11 = sbr.rel (0) target = $region5
    $region4: #{tpu_custom_call.1} parent=1 // pred_region
      %13 = vsyncadd [#allocation3], 0
      %s15 = sshll.u32 %s0, 4
      %s16 = int_to_ptr.hbm [resolvable:$true] %s15
      %s17 = sshll.u32 [#allocation2], 4
      %s18 = int_to_ptr.vmem [resolvable:$true] %s17
      %20 = dma.hbm_to_vmem [thread:$0]  %s16, 16, %s18, [#allocation3]
    $region5: #{tpu_custom_call.1} parent=1 // pred_fallthru
      _
    // Predicated region
    $region6: #{tpu_custom_call.1} parent=1 // pred_check
      _
    $region7: #{tpu_custom_call.1} parent=1 // pred_check_branch
      %22 = sbr.rel (0) target = $region9
    $region8: #{tpu_custom_call.1} parent=1 // pred_region
      %24 = vsyncadd [#allocation6], 0
      %s25 = sshll.u32 %s1, 4
      %s26 = int_to_ptr.hbm [resolvable:$true] %s25
      %s27 = sshll.u32 [#allocation5], 4
      %s28 = int_to_ptr.vmem [resolvable:$true] %s27
      %33 = dma.hbm_to_vmem [thread:$0]  %s26, 512, %s28, [#allocation6], 128, 128, 8
    $region9: #{tpu_custom_call.1} parent=1 // pred_fallthru
      _
    // Predicated region
    $region10: #{tpu_custom_call.1} parent=1 // pred_check
      _
    $region11: #{tpu_custom_call.1} parent=1 // pred_check_branch
      %35 = sbr.rel (0) target = $region13
    $region12: #{tpu_custom_call.1} parent=1 // pred_region
      %37 = dma.done [#allocation3], 16
    $region13: #{tpu_custom_call.1} parent=1 // pred_fallthru
      _
    // Predicated region
    $region14: #{tpu_custom_call.1} parent=1 // pred_check
      _
    $region15: #{tpu_custom_call.1} parent=1 // pred_check_branch
      %39 = sbr.rel (0) target = $region17
    $region16: #{tpu_custom_call.1} parent=1 // pred_region
      %41 = dma.done [#allocation6], 512
    $region17: #{tpu_custom_call.1} parent=1 // pred_fallthru
      _
    %v42 = vld [vmem:[#allocation2] sm:$0x1]
    %v43 = vld [vmem:[#allocation5] sm:$0xff]
    %v44 = vld [vmem:[#allocation5 + $0x8] sm:$0xff]
    %v45 = vld [vmem:[#allocation5 + $0x10] sm:$0xff]
    %v46 = vld [vmem:[#allocation5 + $0x18] sm:$0xff]
    %v47 = vlaneseq
    %v48 = vshrl.u32 %v47, 7
    %v49 = vadd.s32 %v48, 8
    %v50 = vadd.s32 %v48, 16
    %v51 = vadd.s32 %v48, 24
    %v52 = vperm.slane %v42, 0
    %vm53 = vcmp.eq.s32.totalorder %v48, %v52
    %vm54 = vcmp.eq.s32.totalorder %v49, %v52
    %vm55 = vcmp.eq.s32.totalorder %v50, %v52
    %vm56 = vcmp.eq.s32.totalorder %v51, %v52
    %v57 = vsel %vm53, 1, 0
    %v58 = vsel %vm54, 1, 0
    %v59 = vsel %vm55, 1, 0
    %v60 = vsel %vm56, 1, 0
    %v61 = vcvt.s32.f32 %v57
    %v62 = vcvt.s32.f32 %v58
    %v63 = vcvt.s32.f32 %v59
    %v64 = vcvt.s32.f32 %v60
    %65 = vxpose.xlu0.b32.start [1/16] %v61, 128
    %66 = vxpose.xlu0.b32.cont [2/16] %v62, 128
    %67 = vxpose.xlu0.b32.cont [3/16] %v63, 128
    %68 = vxpose.xlu0.b32.cont [4/16] %v64, 128
    %69 = vxpose.xlu0.b32.cont [5/16] 0.0, 128
    %70 = vxpose.xlu0.b32.cont [6/16] 0.0, 128
    %71 = vxpose.xlu0.b32.cont [7/16] 0.0, 128
    %72 = vxpose.xlu0.b32.cont [8/16] 0.0, 128
    %73 = vxpose.xlu0.b32.cont [9/16] 0.0, 128
    %74 = vxpose.xlu0.b32.cont [10/16] 0.0, 128
    %75 = vxpose.xlu0.b32.cont [11/16] 0.0, 128
    %76 = vxpose.xlu0.b32.cont [12/16] 0.0, 128
    %77 = vxpose.xlu0.b32.cont [13/16] 0.0, 128
    %78 = vxpose.xlu0.b32.cont [14/16] 0.0, 128
    %79 = vxpose.xlu0.b32.cont [15/16] 0.0, 128
    %80 = vxpose.xlu0.b32.end [16/16] 0.0, 128
    %v81 = vpop.trf.xlu0
    %v82 = vpop.trf.xlu0
    %v83 = vpop.trf.xlu0
    %v84 = vpop.trf.xlu0
    %v85 = vpop.trf.xlu0
    %v86 = vpop.trf.xlu0
    %v87 = vpop.trf.xlu0
    %v88 = vpop.trf.xlu0
    %v89 = vpop.trf.xlu0
    %v90 = vpop.trf.xlu0
    %v91 = vpop.trf.xlu0
    %v92 = vpop.trf.xlu0
    %v93 = vpop.trf.xlu0
    %v94 = vpop.trf.xlu0
    %v95 = vpop.trf.xlu0
    %v96 = vpop.trf.xlu0
    %vm97 = vcmask 261120
    %v99 = vsel %vm97, %v81, 0
    %v102 = vsel %vm97, %v82, 0
    %v105 = vsel %vm97, %v83, 0
    %v108 = vsel %vm97, %v84, 0
    %v111 = vsel %vm97, %v85, 0
    %v114 = vsel %vm97, %v86, 0
    %v117 = vsel %vm97, %v87, 0
    %v120 = vsel %vm97, %v88, 0
    %v123 = vsel %vm97, %v89, 0
    %v126 = vsel %vm97, %v90, 0
    %v129 = vsel %vm97, %v91, 0
    %v132 = vsel %vm97, %v92, 0
    %v135 = vsel %vm97, %v93, 0
    %v138 = vsel %vm97, %v94, 0
    %v141 = vsel %vm97, %v95, 0
    %v144 = vsel %vm97, %v96, 0
    %146 = vmatpush.msra.mxu0 0.0
    %147 = vmatpush.msra.mxu0 0.0
    %148 = vmatpush.msra.mxu0 0.0
    %149 = vmatpush.msra.mxu0 0.0
    %150 = vmatpush.msra.mxu0 0.0
    %151 = vmatpush.msra.mxu0 0.0
    %152 = vmatpush.msra.mxu0 0.0
    %153 = vmatpush.msra.mxu0 0.0
    %154 = vmatpush.msra.mxu0 0.0
    %155 = vmatpush.msra.mxu0 0.0
    %156 = vmatpush.msra.mxu0 0.0
    %157 = vmatpush.msra.mxu0 0.0
    %158 = vmatpush.msra.mxu0 %v46
    %159 = vmatpush.msra.mxu0 %v45
    %160 = vmatpush.msra.mxu0 %v44
    %161 = vmatpush.msra.mxu0 %v43
    %162 = vmatmul.f32.gmra.mxu0 %v99
    %v163 = vpop.f32.mrf.mxu0
    %v164 = vadd.f32 0.0, %v163
    %165 = vmatmul.f32.gmra.mxu0 %v102
    %v166 = vpop.f32.mrf.mxu0
    %v167 = vadd.f32 0.0, %v166
    %168 = vmatmul.f32.gmra.mxu0 %v105
    %v169 = vpop.f32.mrf.mxu0
    %v170 = vadd.f32 0.0, %v169
    %171 = vmatmul.f32.gmra.mxu0 %v108
    %v172 = vpop.f32.mrf.mxu0
    %v173 = vadd.f32 0.0, %v172
    %174 = vmatmul.f32.gmra.mxu0 %v111
    %v175 = vpop.f32.mrf.mxu0
    %v176 = vadd.f32 0.0, %v175
    %177 = vmatmul.f32.gmra.mxu0 %v114
    %v178 = vpop.f32.mrf.mxu0
    %v179 = vadd.f32 0.0, %v178
    %180 = vmatmul.f32.gmra.mxu0 %v117
    %v181 = vpop.f32.mrf.mxu0
    %v182 = vadd.f32 0.0, %v181
    %183 = vmatmul.f32.gmra.mxu0 %v120
    %v184 = vpop.f32.mrf.mxu0
    %v185 = vadd.f32 0.0, %v184
    %186 = vmatmul.f32.gmra.mxu0 %v123
    %v187 = vpop.f32.mrf.mxu0
    %v188 = vadd.f32 0.0, %v187
    %189 = vmatmul.f32.gmra.mxu0 %v126
    %v190 = vpop.f32.mrf.mxu0
    %v191 = vadd.f32 0.0, %v190
    %192 = vmatmul.f32.gmra.mxu0 %v129
    %v193 = vpop.f32.mrf.mxu0
    %v194 = vadd.f32 0.0, %v193
    %195 = vmatmul.f32.gmra.mxu0 %v132
    %v196 = vpop.f32.mrf.mxu0
    %v197 = vadd.f32 0.0, %v196
    %198 = vmatmul.f32.gmra.mxu0 %v135
    %v199 = vpop.f32.mrf.mxu0
    %v200 = vadd.f32 0.0, %v199
    %201 = vmatmul.f32.gmra.mxu0 %v138
    %v202 = vpop.f32.mrf.mxu0
    %v203 = vadd.f32 0.0, %v202
    %204 = vmatmul.f32.gmra.mxu0 %v141
    %v205 = vpop.f32.mrf.mxu0
    %v206 = vadd.f32 0.0, %v205
    %207 = vmatmul.f32.gmra.mxu0 %v144
    %v208 = vpop.f32.mrf.mxu0
    %v209 = vadd.f32 0.0, %v208
    %210 = vdwg.mxu0
    %211 = vst [vmem:[#allocation7] sm:$0xff] %v164
    %212 = vst [vmem:[#allocation7 + $0x8] sm:$0xff] %v167
    %213 = vst [vmem:[#allocation7 + $0x10] sm:$0xff] %v170
    %214 = vst [vmem:[#allocation7 + $0x18] sm:$0xff] %v173
    %215 = vst [vmem:[#allocation7 + $0x20] sm:$0xff] %v176
    %216 = vst [vmem:[#allocation7 + $0x28] sm:$0xff] %v179
    %217 = vst [vmem:[#allocation7 + $0x30] sm:$0xff] %v182
    %218 = vst [vmem:[#allocation7 + $0x38] sm:$0xff] %v185
    %219 = vst [vmem:[#allocation7 + $0x40] sm:$0xff] %v188
    %220 = vst [vmem:[#allocation7 + $0x48] sm:$0xff] %v191
    %221 = vst [vmem:[#allocation7 + $0x50] sm:$0xff] %v194
    %222 = vst [vmem:[#allocation7 + $0x58] sm:$0xff] %v197
    %223 = vst [vmem:[#allocation7 + $0x60] sm:$0xff] %v200
    %224 = vst [vmem:[#allocation7 + $0x68] sm:$0xff] %v203
    %225 = vst [vmem:[#allocation7 + $0x70] sm:$0xff] %v206
    %226 = vst [vmem:[#allocation7 + $0x78] sm:$0xff] %v209
    // Predicated region
    $region18: #{tpu_custom_call.1} parent=1 // pred_check
      _
    $region19: #{tpu_custom_call.1} parent=1 // pred_check_branch
      %228 = sbr.rel (0) target = $region21
    $region20: #{tpu_custom_call.1} parent=1 // pred_region
      %230 = vsyncadd [#allocation4], 0
      %s231 = sshll.u32 [#allocation7], 4
      %s232 = int_to_ptr.vmem [resolvable:$true] %s231
      %s233 = sshll.u32 %s2, 4
      %s234 = int_to_ptr.hbm [resolvable:$true] %s233
      %239 = dma.vmem_to_hbm [thread:$0]  %s232, 2048, %s234, [#allocation4], 128, 128, 8
    $region21: #{tpu_custom_call.1} parent=1 // pred_fallthru
      _
    // Predicated region
    $region22: #{tpu_custom_call.1} parent=1 // pred_check
      _
    $region23: #{tpu_custom_call.1} parent=1 // pred_check_branch
      %241 = sbr.rel (0) target = $region25
    $region24: #{tpu_custom_call.1} parent=1 // pred_region
      %243 = dma.done [#allocation4], 2048
    $region25: #{tpu_custom_call.1} parent=1 // pred_fallthru
      _
    %244 = vsyncpa [#allocation3], 1
    %245 = vsyncpa [#allocation6], 1
    %246 = vsyncpa [#allocation4], 1

</llo_original>
